<compile_context>
chip_gen: v6e
topology: v6e:2x2x1
jax: 0.10.0
libtpu: 0.0.40
codegen_flags: <defaults>
</compile_context>

<pallas_src>
import math

import jax
import jax.numpy as jnp
from jax.experimental import pallas as pl
from jax.experimental.pallas import tpu as pltpu


def _lc_kernel_bias(x_ref, w_ref, b_ref, o_ref):
    # x_ref: [TN, TD*m1], w_ref: [TD*m1, TD*m2] (block-diagonal),
    # b_ref: [1, TD*m2],  o_ref: [TN, TD*m2]
    h = jnp.dot(x_ref[...], w_ref[...], preferred_element_type=jnp.float32)
    o_ref[...] = (h + b_ref[...].astype(jnp.float32)).astype(o_ref.dtype)


def _lc_kernel_nobias(x_ref, w_ref, o_ref):
    h = jnp.dot(x_ref[...], w_ref[...], preferred_element_type=jnp.float32)
    o_ref[...] = h.astype(o_ref.dtype)


def _choose_node_block(d, m1, m2, max_nodes_per_block=16):
    """Smallest node-block TD (<= max) whose packed widths TD*m1 and TD*m2 are
    lane-aligned (multiples of 128) -> unmasked vector loads/stores.
    Falls back to a single node block (TD = d), which is always layout-legal
    (block dims equal to full array dims)."""
    for td in range(1, max_nodes_per_block + 1):
        if (td * m1) % 128 == 0 and (td * m2) % 128 == 0:
            return td
    # TODO(synk): for very large d with lane-unfriendly m1/m2 this fallback
    # builds a (d*m1, d*m2) block-diagonal weight; cap TD if that ever matters.
    return d


def locally_connected(x, weight, bias=None, *, batch_block=512, node_block=None):
    """x: [n, d, m1], weight: [d, m1, m2], bias: [d, m2] or None -> [n, d, m2].

    batch_block: rows of x per grid step (keep ~256-512 on v7x, 512-1024 on
    v6e; default 512 is safe on all generations at NOTEARS-scale m1/m2).
    """
    n, d, m1 = x.shape
    d_w, m1_w, m2 = weight.shape
    assert d == d_w and m1 == m1_w
    if bias is not None:
        assert bias.shape == (d, m2)

    td = node_block if node_block is not None else _choose_node_block(d, m1, m2)
    gd = pl.cdiv(d, td)
    d_pad = gd * td

    if n <= batch_block:
        tn = n                                  # single batch tile, no padding
    else:
        tn = max(8, (batch_block // 8) * 8)     # keep sublane-aligned tiles
    gn = pl.cdiv(n, tn)
    n_pad = gn * tn

    # Zero-padding is semantically inert (padded rows/nodes are sliced off).
    if d_pad != d:
        x = jnp.pad(x, ((0, 0), (0, d_pad - d), (0, 0)))
        weight = jnp.pad(weight, ((0, d_pad - d), (0, 0), (0, 0)))
        if bias is not None:
            bias = jnp.pad(bias, ((0, d_pad - d), (0, 0)))
    if n_pad != n:
        x = jnp.pad(x, ((0, n_pad - n), (0, 0), (0, 0)))

    # Pack nodes along lanes: free reshape of the contiguous [n, d, m1] layout.
    x2d = x.reshape(n_pad, d_pad * m1)

    # Block-diagonal weights per node block: W[g, t*m1+i, s*m2+o] = w[g*TD+t, i, o] * (t == s).
    eye = jnp.eye(td, dtype=weight.dtype)
    w_bd = jnp.einsum('gtio,ts->gtiso', weight.reshape(gd, td, m1, m2), eye)
    w_bd = w_bd.reshape(gd, td * m1, td * m2)

    # Grid: node blocks OUTER (weight resident across inner batch steps), batch tiles INNER.
    x_spec = pl.BlockSpec((tn, td * m1), lambda jd, jn: (jn, jd))
    w_spec = pl.BlockSpec((None, td * m1, td * m2), lambda jd, jn: (jd, 0, 0))
    o_spec = pl.BlockSpec((tn, td * m2), lambda jd, jn: (jn, jd))
    out_shape = jax.ShapeDtypeStruct((n_pad, d_pad * m2), x.dtype)

    itemsize = jnp.dtype(x.dtype).itemsize
    cost = pl.CostEstimate(
        flops=int(2 * n * d * m1 * m2),
        transcendentals=0,
        bytes_accessed=int((x2d.size + w_bd.size + n_pad * d_pad * m2
                            + (d_pad * m2 if bias is not None else 0)) * itemsize),
    )
    cparams = pltpu.CompilerParams(
        dimension_semantics=("parallel", "parallel"))

    if bias is not None:
        b_bd = bias.reshape(gd, 1, td * m2)
        b_spec = pl.BlockSpec((None, 1, td * m2), lambda jd, jn: (jd, 0, 0))
        out2d = pl.pallas_call(
            _lc_kernel_bias,
            out_shape=out_shape,
            grid=(gd, gn),
            in_specs=[x_spec, w_spec, b_spec],
            out_specs=o_spec,
            compiler_params=cparams,
            cost_estimate=cost,
        )(x2d, w_bd, b_bd)
    else:
        out2d = pl.pallas_call(
            _lc_kernel_nobias,
            out_shape=out_shape,
            grid=(gd, gn),
            in_specs=[x_spec, w_spec],
            out_specs=o_spec,
            compiler_params=cparams,
            cost_estimate=cost,
        )(x2d, w_bd)

    # Free reshape back to [n, d, m2]; slice off node/batch padding.
    return out2d.reshape(n_pad, d_pad, m2)[:n, :d, :]


def init_params(key, num_linear, in_features, out_features, bias=True,
                dtype=jnp.float32):
    """Matches nn.init.uniform_(-sqrt(1/m1), sqrt(1/m1)) deterministically."""
    bound = math.sqrt(1.0 / in_features)
    kw, kb = jax.random.split(key)
    weight = jax.random.uniform(
        kw, (num_linear, in_features, out_features), dtype=dtype,
        minval=-bound, maxval=bound)
    b = None
    if bias:
        b = jax.random.uniform(
            kb, (num_linear, out_features), dtype=dtype,
            minval=-bound, maxval=bound)
    return weight, b


if __name__ == "__main__":
    # Small-but-representative shapes: n=batch, d=num nodes, m1->m2 per node.
    # batch_block is shrunk so the 2-D grid (node blocks x batch tiles) and the
    # padding paths are actually exercised at this small size.
    n, d, m1, m2 = 100, 20, 16, 32
    key = jax.random.PRNGKey(0)
    kx, kp = jax.random.split(key)

    x = jax.random.normal(kx, (n, d, m1), dtype=jnp.float32)
    weight, bias = init_params(kp, d, m1, m2, bias=True)

    # bias=True path
    out = jax.block_until_ready(locally_connected(x, weight, bias, batch_block=32))
    ref = jnp.einsum("ndi,dio->ndo", x, weight) + bias[None, :, :]
    assert out.shape == (n, d, m2)
    assert jnp.allclose(out, ref, atol=1e-4, rtol=1e-4)

    # bias=False path (the module default)
    out_nb = jax.block_until_ready(locally_connected(x, weight, None, batch_block=32))
    ref_nb = jnp.einsum("ndi,dio->ndo", x, weight)
    assert jnp.allclose(out_nb, ref_nb, atol=1e-4, rtol=1e-4)

    print("KERNEL_OK")
</pallas_src>

<mosaic_0001>
module attributes {stable_mosaic.version = 11 : i64} {
  func.func @_lc_kernel_bias(%arg0: i32, %arg1: i32, %arg2: memref<32x128xf32, #tpu.memory_space<vmem>>, %arg3: memref<1x128x256xf32, #tpu.memory_space<vmem>>, %arg4: memref<1x1x256xf32, #tpu.memory_space<vmem>>, %arg5: memref<32x256xf32, #tpu.memory_space<vmem>>) attributes {dimension_semantics = [#tpu.dimension_semantics<parallel>, #tpu.dimension_semantics<parallel>], iteration_bounds = array<i64: 3, 4>, scalar_prefetch = 0 : i64, scratch_operands = 0 : i64, tpu.core_type = #tpu.core_type<tc>, window_params = [{transform_indices = @transform_0, window_bounds = array<i64: 32, 128>}, {transform_indices = @transform_1, window_bounds = array<i64: 1, 128, 256>}, {transform_indices = @transform_2, window_bounds = array<i64: 1, 1, 256>}, {transform_indices = @transform_3, window_bounds = array<i64: 32, 256>}]} {
    %c0 = arith.constant 0 : index
    %c0_0 = arith.constant 0 : index
    %0 = vector.load %arg2[%c0, %c0_0] : memref<32x128xf32, #tpu.memory_space<vmem>>, vector<32x128xf32>
    %c0_1 = arith.constant 0 : index
    %c0_2 = arith.constant 0 : index
    %c0_3 = arith.constant 0 : index
    %1 = vector.load %arg3[%c0_1, %c0_2, %c0_3] : memref<1x128x256xf32, #tpu.memory_space<vmem>>, vector<1x128x256xf32>
    %2 = vector.shape_cast %1 : vector<1x128x256xf32> to vector<128x256xf32>
    %cst = arith.constant dense<0.000000e+00> : vector<32x256xf32>
    %3 = tpu.matmul %0, %2, %cst {dimension_numbers = #tpu.dot_dimension_numbers<[1], [0], [0], [1], [0, 0, 1, 1], [], []>} : vector<32x128xf32>, vector<128x256xf32>, vector<32x256xf32> -> vector<32x256xf32>
    %c0_4 = arith.constant 0 : index
    %c0_5 = arith.constant 0 : index
    %c0_6 = arith.constant 0 : index
    %4 = vector.load %arg4[%c0_4, %c0_5, %c0_6] : memref<1x1x256xf32, #tpu.memory_space<vmem>>, vector<1x1x256xf32>
    %5 = vector.shape_cast %4 : vector<1x1x256xf32> to vector<1x256xf32>
    %6 = vector.broadcast %5 : vector<1x256xf32> to vector<32x256xf32>
    %7 = arith.addf %3, %6 : vector<32x256xf32>
    %c0_7 = arith.constant 0 : index
    %c0_8 = arith.constant 0 : index
    %8 = vector.load %arg5[%c0_7, %c0_8] : memref<32x256xf32, #tpu.memory_space<vmem>>, vector<32x256xf32>
    tpu.vector_store %arg5[%c0_7, %c0_8], %7 {strides = array<i32>} : memref<32x256xf32, #tpu.memory_space<vmem>>, vector<32x256xf32>,
    return
  }
  func.func @transform_0(%arg0: i32, %arg1: i32) -> (i32, i32) {
    %c0_i32 = arith.constant 0 : i32
    return %arg1, %arg0 : i32, i32
  }
  func.func @transform_1(%arg0: i32, %arg1: i32) -> (i32, i32, i32) {
    %c0_i32 = arith.constant 0 : i32
    %c0_i32_0 = arith.constant 0 : i32
    %c0_i32_1 = arith.constant 0 : i32
    return %arg0, %c0_i32, %c0_i32_0 : i32, i32, i32
  }
  func.func @transform_2(%arg0: i32, %arg1: i32) -> (i32, i32, i32) {
    %c0_i32 = arith.constant 0 : i32
    %c0_i32_0 = arith.constant 0 : i32
    %c0_i32_1 = arith.constant 0 : i32
    return %arg0, %c0_i32, %c0_i32_0 : i32, i32, i32
  }
  func.func @transform_3(%arg0: i32, %arg1: i32) -> (i32, i32) {
    %c0_i32 = arith.constant 0 : i32
    return %arg1, %arg0 : i32, i32
  }
}

</mosaic_0001>

<llo_original>
// kernel: tpu_custom_call.1
$region0: #{tpu_custom_call.1}
  #allocation0 [shape = 'u32[]', space=smem, size = 0x4, offset = 0x4, fixed_abs, tag = 'smem constant byte address 0x4 - core index']
  #allocation1 [shape = 'u32[144,128]{1,0:T(1,128)}', space=vmem, size = 0x12000, scoped, tag = 'internal scratch']
  %s0 = inlined_call_operand.hbm [shape: f32[128,384], index: 0, kind: input, shape index: {}]
  %s1 = inlined_call_operand.hbm [shape: f32[3,128,256], index: 1, kind: input, shape index: {}]
  %s2 = inlined_call_operand.hbm [shape: f32[3,1,256], index: 2, kind: input, shape index: {}]
  %s3 = inlined_call_operand.hbm [shape: f32[128,768], index: 3, kind: output, shape index: {}]
  %s4 = sld [smem:[#allocation0]]
  $region57: #{tpu_custom_call.1} parent=0
    _
  %s6 = ssub.s32 1, %s4
  %s7 = scalar_select 0, %s6, %s4
  $region1: #{tpu_custom_call.1} parent=0
    #allocation2 [shape = 'u8[32768]{0}', space=vmem, size = 0x8000, scoped, tag = 'input window, operand 0']
    #allocation3 [shape = 's32[2]{0}', space=sflag, size = 0x8, scoped, tag = 'scoped memory for tpu_custom_call.1']
    #allocation4 [shape = 's32[2]{0}', space=sflag, size = 0x8, scoped, tag = 'scoped memory for tpu_custom_call.1']
    #allocation5 [shape = 'u8[262144]{0}', space=vmem, size = 0x40000, scoped, tag = 'input window, operand 1']
    #allocation6 [shape = 's32[2]{0}', space=sflag, size = 0x8, scoped, tag = 'scoped memory for tpu_custom_call.1']
    #allocation7 [shape = 'u8[2048]{0}', space=vmem, size = 0x800, scoped, tag = 'input window, operand 2']
    #allocation8 [shape = 'u8[65536]{0}', space=vmem, size = 0x10000, scoped, tag = 'output window, operand 0']
    %8 = vsyncpa [#allocation3], 0
    %s9 = scalar_lea.sflag [#allocation3], 1
    %10 = vsyncpa %s9, 0
    %11 = vsyncpa [#allocation6], 0
    %s12 = scalar_lea.sflag [#allocation6], 1
    %13 = vsyncpa %s12, 0
    %14 = vsyncpa [#allocation4], 0
    %s15 = scalar_lea.sflag [#allocation4], 1
    %16 = vsyncpa %s15, 0
    loop: start=0, step=1, limit=14
    $region2: #{tpu_custom_call.1} parent=1 // loop_pre_header
      _
    $region3: #{tpu_custom_call.1} parent=1 // loop_header
      %s18 = sphi 0, %s22
      %p19 = scmp.ge.s32.totalorder %s18, 14
      %s25 = sphi 0, %s37
      %s26 = sphi 0, %s33
      %s27 = sphi 0, %s25
      %s28 = sphi 0, %s26
      %s29 = sphi 0, %s27
      %s30 = sphi 0, %s28
      %s42 = sphi 0, %s44
      %s45 = sphi 0, %s42
      %s46 = sphi 0, %s45
      %s62 = sphi 0, %s46
      %s68 = sphi 0, %s70
      %s71 = sphi 0, %s68
      %s72 = sphi 0, %s71
      %s88 = sphi 0, %s72
      %s94 = sphi 0, %s96
      %s97 = sphi 0, %s94
      %s98 = sphi 0, %s97
      %s114 = sphi 0, %s98
      %s122 = sphi 0, %s124
      %s125 = sphi 0, %s122
      %s126 = sphi 0, %s125
      %s142 = sphi 0, %s126
    $region4: #{tpu_custom_call.1} parent=1 // loop_header_branch
      %21 = sbr.rel (%p19) target = $region8
    $region5: #{tpu_custom_call.1} parent=1 // loop_body
      %s23 = ssub.s32 %s18, 1
      %s24 = ssub.s32 %s18, 2
      %s31 = sadd.s32 1, %s26
      %p32 = scmp.ge.s32.totalorder %s31, 4
      %s33 = scalar_select %p32, 0, %s31
      %s34 = sadd.s32 1, %s25
      %s35 = scalar_select %p32, %s34, %s25
      %p36 = scmp.ge.s32.totalorder %s35, 3
      %s37 = scalar_select %p36, 0, %s35
      %s38 = ssub.s32 %s26, %s33
      %s39 = ssub.s32 %s25, %s37
      %s40 = sor.u32 %s38, %s39
      %p41 = scmp.eq.s32.totalorder %s40, 0
      %s43 = sadd.s32 %s42, 1
      %s44 = scalar_select %p41, %s42, %s43
      %p47 = pneg %p41
      %p48 = scmp.eq.s32.totalorder %s18, 11
      %p49 = por %p47, %p48
      %p50 = scmp.ne.s32.totalorder %s42, %s45
      %p51 = scmp.eq.s32.totalorder %s18, 0
      %p52 = por %p50, %p51
      %p53 = scmp.ne.s32.totalorder %s42, %s45
      %p54 = scmp.eq.s32.totalorder %s23, 11
      %p55 = por %p53, %p54
      %p56 = scmp.ne.s32.totalorder %s45, %s46
      %p57 = scmp.eq.s32.totalorder %s23, 0
      %p58 = por %p56, %p57
      %p59 = scmp.ne.s32.totalorder %s45, %s46
      %p60 = scmp.eq.s32.totalorder %s24, 11
      %p61 = por %p59, %p60
      %p63 = scmp.ne.s32.totalorder %s46, %s62
      %p64 = scmp.eq.s32.totalorder %s24, 0
      %p65 = por %p63, %p64
      %s66 = ssub.s32 %s25, %s37
      %p67 = scmp.eq.s32.totalorder %s66, 0
      %s69 = sadd.s32 %s68, 1
      %s70 = scalar_select %p67, %s68, %s69
      %p73 = pneg %p67
      %p74 = scmp.eq.s32.totalorder %s18, 11
      %p75 = por %p73, %p74
      %p76 = scmp.ne.s32.totalorder %s68, %s71
      %p77 = scmp.eq.s32.totalorder %s18, 0
      %p78 = por %p76, %p77
      %p79 = scmp.ne.s32.totalorder %s68, %s71
      %p80 = scmp.eq.s32.totalorder %s23, 11
      %p81 = por %p79, %p80
      %p82 = scmp.ne.s32.totalorder %s71, %s72
      %p83 = scmp.eq.s32.totalorder %s23, 0
      %p84 = por %p82, %p83
      %p85 = scmp.ne.s32.totalorder %s71, %s72
      %p86 = scmp.eq.s32.totalorder %s24, 11
      %p87 = por %p85, %p86
      %p89 = scmp.ne.s32.totalorder %s72, %s88
      %p90 = scmp.eq.s32.totalorder %s24, 0
      %p91 = por %p89, %p90
      %s92 = ssub.s32 %s25, %s37
      %p93 = scmp.eq.s32.totalorder %s92, 0
      %s95 = sadd.s32 %s94, 1
      %s96 = scalar_select %p93, %s94, %s95
      %p99 = pneg %p93
      %p100 = scmp.eq.s32.totalorder %s18, 11
      %p101 = por %p99, %p100
      %p102 = scmp.ne.s32.totalorder %s94, %s97
      %p103 = scmp.eq.s32.totalorder %s18, 0
      %p104 = por %p102, %p103
      %p105 = scmp.ne.s32.totalorder %s94, %s97
      %p106 = scmp.eq.s32.totalorder %s23, 11
      %p107 = por %p105, %p106
      %p108 = scmp.ne.s32.totalorder %s97, %s98
      %p109 = scmp.eq.s32.totalorder %s23, 0
      %p110 = por %p108, %p109
      %p111 = scmp.ne.s32.totalorder %s97, %s98
      %p112 = scmp.eq.s32.totalorder %s24, 11
      %p113 = por %p111, %p112
      %p115 = scmp.ne.s32.totalorder %s98, %s114
      %p116 = scmp.eq.s32.totalorder %s24, 0
      %p117 = por %p115, %p116
      %s118 = ssub.s32 %s26, %s33
      %s119 = ssub.s32 %s25, %s37
      %s120 = sor.u32 %s118, %s119
      %p121 = scmp.eq.s32.totalorder %s120, 0
      %s123 = sadd.s32 %s122, 1
      %s124 = scalar_select %p121, %s122, %s123
      %p127 = pneg %p121
      %p128 = scmp.eq.s32.totalorder %s18, 11
      %p129 = por %p127, %p128
      %p130 = scmp.ne.s32.totalorder %s122, %s125
      %p131 = scmp.eq.s32.totalorder %s18, 0
      %p132 = por %p130, %p131
      %p133 = scmp.ne.s32.totalorder %s122, %s125
      %p134 = scmp.eq.s32.totalorder %s23, 11
      %p135 = por %p133, %p134
      %p136 = scmp.ne.s32.totalorder %s125, %s126
      %p137 = scmp.eq.s32.totalorder %s23, 0
      %p138 = por %p136, %p137
      %p139 = scmp.ne.s32.totalorder %s125, %s126
      %p140 = scmp.eq.s32.totalorder %s24, 11
      %p141 = por %p139, %p140
      %p143 = scmp.ne.s32.totalorder %s126, %s142
      %p144 = scmp.eq.s32.totalorder %s24, 0
      %p145 = por %p143, %p144
      %p146 = scmp.le.s32.totalorder 1, %s18
      %p147 = scmp.lt.s32.totalorder %s18, 13
      %p148 = pnand %p146, %p147
      %p149 = pneg %p148
      // Predicated region
      $region9: #{tpu_custom_call.1} parent=5 // pred_check
        _
      $region10: #{tpu_custom_call.1} parent=5 // pred_check_branch
        %151 = sbr.rel (%p148) target = $region12
      $region11: #{tpu_custom_call.1} parent=5 // pred_region
        %s152 = ssub.s32 %s18, 1
      $region12: #{tpu_custom_call.1} parent=5 // pred_fallthru
        _
      %p153 = scmp.lt.s32.totalorder %s18, 12
      // Predicated region
      $region13: #{tpu_custom_call.1} parent=5 // pred_check
        %p154 = pneg %p153
      $region14: #{tpu_custom_call.1} parent=5 // pred_check_branch
        %156 = sbr.rel (%p154) target = $region16
      $region15: #{tpu_custom_call.1} parent=5 // pred_region
        // Predicated region
        $region17: #{tpu_custom_call.1} parent=15 // pred_check
          %p157 = pneg %p52
        $region18: #{tpu_custom_call.1} parent=15 // pred_check_branch
          %159 = sbr.rel (%p157) target = $region20
        $region19: #{tpu_custom_call.1} parent=15 // pred_region
          %s160 = sand.u32 %s42, 1
          %s161 = scalar_lea.sflag [#allocation3], %s160
          %s162 = sand.u32 %s42, 1
          %s163 = smul.addr %s162, 32
          %s164 = scalar_lea.vmem [#allocation2], %s163
          %s165 = smul.u32 4, %s26
          %s167 = ssub.s32 512, 512
          %168 = vsyncadd %s161, %s167
          %s169 = smul.addr %s165, 3
          %s170 = sadd.s32 %s25, %s169
          %s171 = smul.addr %s170, 128
          %s172 = scalar_lea.hbm %s0, %s171
          %s173 = sshll.u32 %s164, 4
          %s174 = int_to_ptr.vmem [resolvable:$true] %s173
          %179 = dma.hbm_to_vmem [thread:$0]  %s172, 512, %s174, %s161, 384, 128, 8
        $region20: #{tpu_custom_call.1} parent=15 // pred_fallthru
          _
        // Predicated region
        $region21: #{tpu_custom_call.1} parent=15 // pred_check
          %p180 = pneg %p78
        $region22: #{tpu_custom_call.1} parent=15 // pred_check_branch
          %182 = sbr.rel (%p180) target = $region24
        $region23: #{tpu_custom_call.1} parent=15 // pred_region
          %s183 = sand.u32 %s18, 1
          %s184 = scalar_lea.sflag [#allocation6], %s183
          %s185 = sand.u32 %s68, 1
          %s186 = smul.addr %s185, 256
          %s187 = scalar_lea.vmem [#allocation5], %s186
          %s189 = ssub.s32 4096, 4096
          %190 = vsyncadd %s184, %s189
          %s191 = smul.addr %s25, 32
          %s192 = smul.addr %s191, 128
          %s193 = scalar_lea.hbm %s1, %s192
          %s194 = sshll.u32 %s187, 4
          %s195 = int_to_ptr.vmem [resolvable:$true] %s194
          %200 = dma.hbm_to_vmem [thread:$0]  %s193, 4096, %s195, %s184, 256, 256, 16
        $region24: #{tpu_custom_call.1} parent=15 // pred_fallthru
          _
        // Predicated region
        $region25: #{tpu_custom_call.1} parent=15 // pred_check
          %p201 = pneg %p104
        $region26: #{tpu_custom_call.1} parent=15 // pred_check_branch
          %203 = sbr.rel (%p201) target = $region28
        $region27: #{tpu_custom_call.1} parent=15 // pred_region
          %s204 = sand.u32 %s18, 1
          %s205 = scalar_lea.sflag [#allocation6], %s204
          %s206 = sand.u32 %s94, 1
          %s207 = smul.addr %s206, 2
          %s208 = scalar_lea.vmem [#allocation7], %s207
          %s210 = ssub.s32 32, 32
          %211 = vsyncadd %s205, %s210
          %s212 = smul.addr %s25, 2
          %s213 = smul.addr %s212, 16
          %s214 = scalar_lea.hbm %s2, %s213
          %s216 = sshll.u32 %s208, 4
          %s217 = int_to_ptr.vmem [resolvable:$true] %s216
          %219 = dma.hbm_to_vmem [thread:$0]  %s214, 32, %s217, %s205
        $region28: #{tpu_custom_call.1} parent=15 // pred_fallthru
          _
      $region16: #{tpu_custom_call.1} parent=5 // pred_fallthru
        _
      %p220 = scmp.le.s32.totalorder 1, %s18
      %p221 = scmp.lt.s32.totalorder %s18, 13
      %p222 = pnand %p220, %p221
      %p223 = pneg %p222
      // Predicated region
      $region29: #{tpu_custom_call.1} parent=5 // pred_check
        _
      $region30: #{tpu_custom_call.1} parent=5 // pred_check_branch
        %225 = sbr.rel (%p222) target = $region32
      $region31: #{tpu_custom_call.1} parent=5 // pred_region
        %s226 = ssub.s32 %s18, 1
        %s227 = sand.u32 %s45, 1
        %s228 = scalar_lea.sflag [#allocation3], %s227
        %s229 = sand.u32 %s45, 1
        %s230 = smul.addr %s229, 32
        %s231 = scalar_lea.vmem [#allocation2], %s230
        // Predicated region
        $region33: #{tpu_custom_call.1} parent=31 // pred_check
          %p232 = pneg %p58
        $region34: #{tpu_custom_call.1} parent=31 // pred_check_branch
          %234 = sbr.rel (%p232) target = $region36
        $region35: #{tpu_custom_call.1} parent=31 // pred_region
          %235 = dma.done %s228, 512
        $region36: #{tpu_custom_call.1} parent=31 // pred_fallthru
          _
        %s236 = sand.u32 %s23, 1
        %s237 = scalar_lea.sflag [#allocation6], %s236
        %s238 = sand.u32 %s71, 1
        %s239 = smul.addr %s238, 256
        %s240 = scalar_lea.vmem [#allocation5], %s239
        // Predicated region
        $region37: #{tpu_custom_call.1} parent=31 // pred_check
          %p241 = pneg %p84
        $region38: #{tpu_custom_call.1} parent=31 // pred_check_branch
          %243 = sbr.rel (%p241) target = $region40
        $region39: #{tpu_custom_call.1} parent=31 // pred_region
          %244 = dma.done %s237, 4096
        $region40: #{tpu_custom_call.1} parent=31 // pred_fallthru
          _
        %s245 = sand.u32 %s23, 1
        %s246 = scalar_lea.sflag [#allocation6], %s245
        %s247 = sand.u32 %s97, 1
        %s248 = smul.addr %s247, 2
        %s249 = scalar_lea.vmem [#allocation7], %s248
        // Predicated region
        $region41: #{tpu_custom_call.1} parent=31 // pred_check
          %p250 = pneg %p110
        $region42: #{tpu_custom_call.1} parent=31 // pred_check_branch
          %252 = sbr.rel (%p250) target = $region44
        $region43: #{tpu_custom_call.1} parent=31 // pred_region
          %253 = dma.done %s246, 32
        $region44: #{tpu_custom_call.1} parent=31 // pred_fallthru
          _
        %s254 = sand.u32 %s45, 1
        %s255 = scalar_lea.sflag [#allocation3], %s254
        %s256 = sand.u32 %s45, 1
        %s257 = smul.addr %s256, 32
        %s258 = scalar_lea.vmem [#allocation2], %s257
        %p259 = pneg %p58
        %p260 = pneg %p55
        %s261 = sand.u32 %s23, 1
        %s262 = scalar_lea.sflag [#allocation6], %s261
        %s263 = sand.u32 %s71, 1
        %s264 = smul.addr %s263, 256
        %s265 = scalar_lea.vmem [#allocation5], %s264
        %p266 = pneg %p84
        %p267 = pneg %p81
        %s268 = sand.u32 %s23, 1
        %s269 = scalar_lea.sflag [#allocation6], %s268
        %s270 = sand.u32 %s97, 1
        %s271 = smul.addr %s270, 2
        %s272 = scalar_lea.vmem [#allocation7], %s271
        %p273 = pneg %p110
        %p274 = pneg %p107
        %p275 = pneg %p138
        %p276 = pneg %p135
        %s277 = sand.u32 %s125, 1
        %s278 = scalar_lea.sflag [#allocation4], %s277
        %s279 = sand.u32 %s125, 1
        %s280 = smul.addr %s279, 64
        %s281 = scalar_lea.vmem [#allocation8], %s280
        %s282 = smul.u32 4, %s28
        %s283 = smul.u32 4, %s28
        %s284 = smul.u32 2, %s27
        %v285 = vld [vmem:[%s231] sm:$0xff]
        %v286 = vld [vmem:[%s231 + $0x8] sm:$0xff]
        %v287 = vld [vmem:[%s231 + $0x10] sm:$0xff]
        %v288 = vld [vmem:[%s231 + $0x18] sm:$0xff]
        %v289 = vld [vmem:[%s240] sm:$0xff]
        %v290 = vld [vmem:[%s240 + $0x8] sm:$0xff]
        %v291 = vld [vmem:[%s240 + $0x10] sm:$0xff]
        %v292 = vld [vmem:[%s240 + $0x18] sm:$0xff]
        %v293 = vld [vmem:[%s240 + $0x20] sm:$0xff]
        %v294 = vld [vmem:[%s240 + $0x28] sm:$0xff]
        %v295 = vld [vmem:[%s240 + $0x30] sm:$0xff]
        %v296 = vld [vmem:[%s240 + $0x38] sm:$0xff]
        %v297 = vld [vmem:[%s240 + $0x40] sm:$0xff]
        %v298 = vld [vmem:[%s240 + $0x48] sm:$0xff]
        %v299 = vld [vmem:[%s240 + $0x50] sm:$0xff]
        %v300 = vld [vmem:[%s240 + $0x58] sm:$0xff]
        %v301 = vld [vmem:[%s240 + $0x60] sm:$0xff]
        %v302 = vld [vmem:[%s240 + $0x68] sm:$0xff]
        %v303 = vld [vmem:[%s240 + $0x70] sm:$0xff]
        %v304 = vld [vmem:[%s240 + $0x78] sm:$0xff]
        %v305 = vld [vmem:[%s240 + $0x80] sm:$0xff]
        %v306 = vld [vmem:[%s240 + $0x88] sm:$0xff]
        %v307 = vld [vmem:[%s240 + $0x90] sm:$0xff]
        %v308 = vld [vmem:[%s240 + $0x98] sm:$0xff]
        %v309 = vld [vmem:[%s240 + $0xa0] sm:$0xff]
        %v310 = vld [vmem:[%s240 + $0xa8] sm:$0xff]
        %v311 = vld [vmem:[%s240 + $0xb0] sm:$0xff]
        %v312 = vld [vmem:[%s240 + $0xb8] sm:$0xff]
        %v313 = vld [vmem:[%s240 + $0xc0] sm:$0xff]
        %v314 = vld [vmem:[%s240 + $0xc8] sm:$0xff]
        %v315 = vld [vmem:[%s240 + $0xd0] sm:$0xff]
        %v316 = vld [vmem:[%s240 + $0xd8] sm:$0xff]
        %v317 = vld [vmem:[%s240 + $0xe0] sm:$0xff]
        %v318 = vld [vmem:[%s240 + $0xe8] sm:$0xff]
        %v319 = vld [vmem:[%s240 + $0xf0] sm:$0xff]
        %v320 = vld [vmem:[%s240 + $0xf8] sm:$0xff]
        %v321 = vld [vmem:[%s249] sm:$0x3]
        %v323 = vlaneseq
        %v324 = vshrl.u32 %v323, 7
        %v325 = vsub.s32 0, %v324
        %v326 = vrot.slane %v321, %v325
        %v327 = vlaneseq
        %v328 = vshrl.u32 %v327, 7
        %v329 = vsub.s32 1, %v328
        %v330 = vrot.slane %v321, %v329
        %333 = vmatprep.subr.mxu0 %v320
        %334 = vmatpush1.msra.mxu0 %v319
        %335 = vmatprep.subr.mxu0 %v318
        %336 = vmatpush1.msra.mxu0 %v317
        %337 = vmatprep.subr.mxu0 %v316
        %338 = vmatpush1.msra.mxu0 %v315
        %339 = vmatprep.subr.mxu0 %v314
        %340 = vmatpush1.msra.mxu0 %v313
        %341 = vmatprep.subr.mxu0 %v312
        %342 = vmatpush1.msra.mxu0 %v311
        %343 = vmatprep.subr.mxu0 %v310
        %344 = vmatpush1.msra.mxu0 %v309
        %345 = vmatprep.subr.mxu0 %v308
        %346 = vmatpush1.msra.mxu0 %v307
        %347 = vmatprep.subr.mxu0 %v306
        %348 = vmatpush1.msra.mxu0 %v305
        %349 = vmatprep.subr.mxu0 %v304
        %350 = vmatpush1.msra.mxu0 %v303
        %351 = vmatprep.subr.mxu0 %v302
        %352 = vmatpush1.msra.mxu0 %v301
        %353 = vmatprep.subr.mxu0 %v300
        %354 = vmatpush1.msra.mxu0 %v299
        %355 = vmatprep.subr.mxu0 %v298
        %356 = vmatpush1.msra.mxu0 %v297
        %357 = vmatprep.subr.mxu0 %v296
        %358 = vmatpush1.msra.mxu0 %v295
        %359 = vmatprep.subr.mxu0 %v294
        %360 = vmatpush1.msra.mxu0 %v293
        %361 = vmatprep.subr.mxu0 %v292
        %362 = vmatpush1.msra.mxu0 %v291
        %363 = vmatprep.subr.mxu0 %v290
        %364 = vmatpush1.msra.mxu0 %v289
        %365 = vmatprep.subr.mxu0 0.0
        %366 = vmatpush2.msra.mxu0 0.0
        %367 = vmatprep.subr.mxu0 0.0
        %368 = vmatpush2.msra.mxu0 0.0
        %369 = vmatprep.subr.mxu0 0.0
        %370 = vmatpush2.msra.mxu0 0.0
        %371 = vmatprep.subr.mxu0 0.0
        %372 = vmatpush2.msra.mxu0 0.0
        %373 = vmatprep.subr.mxu0 0.0
        %374 = vmatpush2.msra.mxu0 0.0
        %375 = vmatprep.subr.mxu0 0.0
        %376 = vmatpush2.msra.mxu0 0.0
        %377 = vmatprep.subr.mxu0 0.0
        %378 = vmatpush2.msra.mxu0 0.0
        %379 = vmatprep.subr.mxu0 0.0
        %380 = vmatpush2.msra.mxu0 0.0
        %381 = vmatprep.subr.mxu0 0.0
        %382 = vmatpush2.msra.mxu0 0.0
        %383 = vmatprep.subr.mxu0 0.0
        %384 = vmatpush2.msra.mxu0 0.0
        %385 = vmatprep.subr.mxu0 0.0
        %386 = vmatpush2.msra.mxu0 0.0
        %387 = vmatprep.subr.mxu0 0.0
        %388 = vmatpush2.msra.mxu0 0.0
        %389 = vmatprep.subr.mxu0 0.0
        %390 = vmatpush2.msra.mxu0 0.0
        %391 = vmatprep.subr.mxu0 0.0
        %392 = vmatpush2.msra.mxu0 0.0
        %393 = vmatprep.subr.mxu0 0.0
        %394 = vmatpush2.msra.mxu0 0.0
        %395 = vmatprep.subr.mxu0 0.0
        %396 = vmatpush2.msra.mxu0 0.0
        %397 = vmatprep.mubr.f32.mxu0 0.0
        %398 = vmatmul.mubr.f32.gmra.mxu0 %v285
        %v399 = vpop.f32.mrf.mxu0
        %v400 = vadd.f32 %v326, %v399
        %v401 = vpop.f32.mrf.mxu0
        %v402 = vadd.f32 %v330, %v401
        %403 = vmatprep.mubr.f32.mxu0 0.0
        %404 = vmatmul.mubr.f32.gmra.mxu0 %v286
        %v405 = vpop.f32.mrf.mxu0
        %v406 = vadd.f32 %v326, %v405
        %v407 = vpop.f32.mrf.mxu0
        %v408 = vadd.f32 %v330, %v407
        %409 = vmatprep.mubr.f32.mxu0 0.0
        %410 = vmatmul.mubr.f32.gmra.mxu0 %v287
        %v411 = vpop.f32.mrf.mxu0
        %v412 = vadd.f32 %v326, %v411
        %v413 = vpop.f32.mrf.mxu0
        %v414 = vadd.f32 %v330, %v413
        %415 = vmatprep.mubr.f32.mxu0 0.0
        %416 = vmatmul.mubr.f32.gmra.mxu0 %v288
        %v417 = vpop.f32.mrf.mxu0
        %v418 = vadd.f32 %v326, %v417
        %v419 = vpop.f32.mrf.mxu0
        %v420 = vadd.f32 %v330, %v419
        %421 = vdwg.mxu0
        %422 = vst [vmem:[%s281] sm:$0xff] %v400
        %423 = vst [vmem:[%s281 + $0x8] sm:$0xff] %v402
        %424 = vst [vmem:[%s281 + $0x10] sm:$0xff] %v406
        %425 = vst [vmem:[%s281 + $0x18] sm:$0xff] %v408
        %426 = vst [vmem:[%s281 + $0x20] sm:$0xff] %v412
        %427 = vst [vmem:[%s281 + $0x28] sm:$0xff] %v414
        %428 = vst [vmem:[%s281 + $0x30] sm:$0xff] %v418
        %429 = vst [vmem:[%s281 + $0x38] sm:$0xff] %v420
        %s430 = sand.u32 %s125, 1
        %s431 = scalar_lea.sflag [#allocation4], %s430
        %s432 = sand.u32 %s125, 1
        %s433 = smul.addr %s432, 64
        %s434 = scalar_lea.vmem [#allocation8], %s433
        // Predicated region
        $region45: #{tpu_custom_call.1} parent=31 // pred_check
          %p435 = pneg %p135
        $region46: #{tpu_custom_call.1} parent=31 // pred_check_branch
          %437 = sbr.rel (%p435) target = $region48
        $region47: #{tpu_custom_call.1} parent=31 // pred_region
          %s438 = smul.u32 4, %s28
          %s439 = smul.u32 2, %s27
          %s441 = ssub.s32 1024, 1024
          %442 = vsyncadd %s431, %s441
          %s443 = smul.addr %s438, 6
          %s444 = sadd.s32 %s439, %s443
          %s445 = smul.addr %s444, 128
          %s446 = scalar_lea.hbm %s3, %s445
          %s447 = sshll.u32 %s434, 4
          %s448 = int_to_ptr.vmem [resolvable:$true] %s447
          %453 = dma.vmem_to_hbm [thread:$0]  %s448, 1024, %s446, %s431, 256, 768, 16
        $region48: #{tpu_custom_call.1} parent=31 // pred_fallthru
          _
      $region32: #{tpu_custom_call.1} parent=5 // pred_fallthru
        _
      %p454 = scmp.le.s32.totalorder 2, %s18
      // Predicated region
      $region49: #{tpu_custom_call.1} parent=5 // pred_check
        %p455 = pneg %p454
      $region50: #{tpu_custom_call.1} parent=5 // pred_check_branch
        %457 = sbr.rel (%p455) target = $region52
      $region51: #{tpu_custom_call.1} parent=5 // pred_region
        %s458 = ssub.s32 %s18, 2
        // Predicated region
        $region53: #{tpu_custom_call.1} parent=51 // pred_check
          %p459 = pneg %p141
        $region54: #{tpu_custom_call.1} parent=51 // pred_check_branch
          %461 = sbr.rel (%p459) target = $region56
        $region55: #{tpu_custom_call.1} parent=51 // pred_region
          %s462 = sand.u32 %s126, 1
          %s463 = scalar_lea.sflag [#allocation4], %s462
          %s464 = sand.u32 %s126, 1
          %s465 = smul.addr %s464, 64
          %s466 = scalar_lea.vmem [#allocation8], %s465
          %467 = dma.done %s463, 1024
        $region56: #{tpu_custom_call.1} parent=51 // pred_fallthru
          _
      $region52: #{tpu_custom_call.1} parent=5 // pred_fallthru
        _
    $region6: #{tpu_custom_call.1} parent=1 // loop_footer
      %s22 = sadd.s32 1, %s18
    $region7: #{tpu_custom_call.1} parent=1 // loop_footer_branch
      %17 = sbr.rel target = $region3
    $region8: #{tpu_custom_call.1} parent=1 // loop_exit
      _
    %468 = vsyncpa [#allocation3], 1
    %s469 = scalar_lea.sflag [#allocation3], 1
    %470 = vsyncpa %s469, 1
    %471 = vsyncpa [#allocation6], 1
    %s472 = scalar_lea.sflag [#allocation6], 1
    %473 = vsyncpa %s472, 1
    %474 = vsyncpa [#allocation4], 1
    %s475 = scalar_lea.sflag [#allocation4], 1
    %476 = vsyncpa %s475, 1

</llo_original>
